<compile_context>
chip_gen: v5e
topology: v5e:2x2
jax: 0.10.0
libtpu: 0.0.40
codegen_flags: <defaults>
</compile_context>

<pallas_src>
import jax
import jax.numpy as jnp
from jax.experimental import pallas as pl
from jax.experimental.pallas import tpu as pltpu


def _round_up(x, m):
    return (x + m - 1) // m * m


_VMEM_LIMIT = 64 * 1024 * 1024  # scoped-VMEM cap; fits every TPU generation (v7x has 64 MiB/TC)


# --------------------------------------------------------------------------------------
# Kernel 1: 2-layer MLP (Linear + ReLU twice; dropout = eval-mode identity)
# --------------------------------------------------------------------------------------
def mlp_kernel(x_ref, w1_ref, b1_ref, w2_ref, b2_ref, z_ref):
    h = jnp.dot(x_ref[...], w1_ref[...], preferred_element_type=jnp.float32) + b1_ref[...]
    h = jnp.maximum(h, 0.0)
    z = jnp.dot(h, w2_ref[...], preferred_element_type=jnp.float32) + b2_ref[...]
    z_ref[...] = jnp.maximum(z, 0.0)


def mlp_forward(x_p, w1_p, b1_p, w2_p, b2_p, *, tile_rows):
    n_pad, in_p = x_p.shape
    h_p = w1_p.shape[1]
    return pl.pallas_call(
        mlp_kernel,
        out_shape=jax.ShapeDtypeStruct((n_pad, h_p), jnp.float32),
        grid_spec=pltpu.PrefetchScalarGridSpec(
            num_scalar_prefetch=0,
            grid=(n_pad // tile_rows,),
            in_specs=[
                pl.BlockSpec((tile_rows, in_p), lambda i: (i, 0)),   # x tile
                pl.BlockSpec((in_p, h_p), lambda i: (0, 0)),         # W1 (resident)
                pl.BlockSpec((1, h_p), lambda i: (0, 0)),            # b1
                pl.BlockSpec((h_p, h_p), lambda i: (0, 0)),          # W2 (resident)
                pl.BlockSpec((1, h_p), lambda i: (0, 0)),            # b2
            ],
            out_specs=pl.BlockSpec((tile_rows, h_p), lambda i: (i, 0)),
        ),
        compiler_params=pltpu.CompilerParams(
            dimension_semantics=("parallel",),
            vmem_limit_bytes=_VMEM_LIMIT,
        ),
    )(x_p, w1_p, b1_p, w2_p, b2_p)


# --------------------------------------------------------------------------------------
# Kernel 2: one-hot-matmul segment-sum + inner-dot + sigmoid (all MXU/VPU, no scalar loop)
# --------------------------------------------------------------------------------------
def agg_kernel(z_ref, v1_ref, e1_ref, v2_ref, e2_ref, out_ref):
    z = z_ref[...]                                   # (n_pad, h_p) resident in VMEM
    n_pad = z.shape[0]
    tile_e = out_ref.shape[1]

    def segment_sum(v_ref, e_ref):
        v_col = v_ref[0]                             # (M, 1) int32 node ids (pad -> 0, masked below)
        e_row = e_ref[0]                             # (1, M) int32 local edge ids (pad -> tile_e)
        m = v_col.shape[0]
        # Gather Z rows via one-hot matmul: sel_nodes[j, n] = (v[j] == n)
        sel_nodes = (jax.lax.broadcasted_iota(jnp.int32, (m, n_pad), 1) == v_col
                     ).astype(jnp.float32)
        gathered = jnp.dot(sel_nodes, z, preferred_element_type=jnp.float32)       # (M, h_p)
        # Scatter-sum into edges via one-hot matmul: sel_edges[r, j] = (e[j] == r)
        sel_edges = (jax.lax.broadcasted_iota(jnp.int32, (tile_e, m), 0) == e_row
                     ).astype(jnp.float32)
        return jnp.dot(sel_edges, gathered, preferred_element_type=jnp.float32)    # (tile_e, h_p)

    ze1 = segment_sum(v1_ref, e1_ref)
    ze2 = segment_sum(v2_ref, e2_ref)

    # inner_dot aggregation: pred[e] = sigmoid(sum_h Ze1[e,h] * Ze2[e,h]); lane-dense store.
    s = jnp.sum(ze1 * ze2, axis=1)                   # (tile_e,)
    out_ref[...] = jax.nn.sigmoid(s)[None, :]        # (1, tile_e)


def aggregation_forward(z_p, v1c, e1c, v2c, e2c, e_pad, *, tile_e):
    n_pad, h_p = z_p.shape
    n_tiles = e_pad // tile_e
    m1 = v1c.shape[1]
    m2 = v2c.shape[1]
    return pl.pallas_call(
        agg_kernel,
        out_shape=jax.ShapeDtypeStruct((1, e_pad), jnp.float32),
        grid_spec=pltpu.PrefetchScalarGridSpec(
            num_scalar_prefetch=0,
            grid=(n_tiles,),
            in_specs=[
                pl.BlockSpec((n_pad, h_p), lambda i: (0, 0)),        # Z resident in VMEM
                pl.BlockSpec((1, m1, 1), lambda i: (i, 0, 0)),       # map-1 node ids (column)
                pl.BlockSpec((1, 1, m1), lambda i: (i, 0, 0)),       # map-1 local edge ids (row)
                pl.BlockSpec((1, m2, 1), lambda i: (i, 0, 0)),       # map-2 node ids (column)
                pl.BlockSpec((1, 1, m2), lambda i: (i, 0, 0)),       # map-2 local edge ids (row)
            ],
            out_specs=pl.BlockSpec((1, tile_e), lambda i: (0, i)),
        ),
        compiler_params=pltpu.CompilerParams(
            dimension_semantics=("parallel",),
            vmem_limit_bytes=_VMEM_LIMIT,
        ),
    )(z_p, v1c, e1c, v2c, e2c)


# --------------------------------------------------------------------------------------
# Wrapper: padding, map sorting/bucketing into fixed-size per-tile chunks, kernel launches
# --------------------------------------------------------------------------------------
def task1_mlp_forward(x, params, V_map1, V_map2, E_map1, E_map2, num_edges):
    w1, b1, w2, b2 = params  # weights pre-transposed to [in, out]; biases [1, out]
    n_nodes, in_dim = x.shape
    hidden = w1.shape[1]
    f32 = jnp.float32

    # Guards (review correctness note): indices must address real nodes / edges.
    assert int(jnp.max(jnp.asarray(V_map1))) < n_nodes and int(jnp.max(jnp.asarray(V_map2))) < n_nodes
    assert int(jnp.max(jnp.asarray(E_map1))) < num_edges and int(jnp.max(jnp.asarray(E_map2))) < num_edges

    # Padded, lane-aligned shapes; big tiles to hit HBM roofline / fill the MXU.
    in_p = _round_up(in_dim, 128)
    h_p = _round_up(hidden, 128)
    tile_rows = min(512, _round_up(n_nodes, 8))
    n_pad = _round_up(n_nodes, tile_rows)
    tile_e = min(512, _round_up(num_edges, 128))
    e_pad = _round_up(num_edges, tile_e)
    n_tiles = e_pad // tile_e

    x_p = jnp.zeros((n_pad, in_p), f32).at[:n_nodes, :in_dim].set(x)
    w1_p = jnp.zeros((in_p, h_p), f32).at[:in_dim, :hidden].set(w1)
    b1_p = jnp.zeros((1, h_p), f32).at[:, :hidden].set(b1)
    w2_p = jnp.zeros((h_p, h_p), f32).at[:hidden, :hidden].set(w2)
    b2_p = jnp.zeros((1, h_p), f32).at[:, :hidden].set(b2)

    # Kernel 1: node embeddings Z (padded hidden columns are exactly zero).
    z_p = mlp_forward(x_p, w1_p, b1_p, w2_p, b2_p, tile_rows=tile_rows)

    # Bucket each (V_map, E_map) pair into fixed-size per-edge-tile chunks.
    # Padding entries get local edge id == tile_e (out of range) so the one-hot never selects them.
    # TODO(synk): cache this sort/bucketing across calls when the graph structure is static.
    def sort_and_chunk(v_map, e_map):
        v_map = jnp.asarray(v_map, jnp.int32)
        e_map = jnp.asarray(e_map, jnp.int32)
        order = jnp.argsort(e_map)
        e_sorted = e_map[order]
        v_sorted = v_map[order]
        bounds = jnp.arange(n_tiles + 1, dtype=jnp.int32) * tile_e
        starts = jnp.searchsorted(e_sorted, bounds, side="left").astype(jnp.int32)
        counts = starts[1:] - starts[:-1]
        m_chunk = max(8, _round_up(int(jnp.max(counts)), 8))
        tile_id = e_sorted // tile_e
        pos = jnp.arange(e_sorted.shape[0], dtype=jnp.int32) - starts[tile_id]
        v_chunk = jnp.zeros((n_tiles, m_chunk), jnp.int32).at[tile_id, pos].set(v_sorted)
        e_chunk = jnp.full((n_tiles, m_chunk), tile_e, jnp.int32).at[tile_id, pos].set(e_sorted % tile_e)
        return v_chunk[:, :, None], e_chunk[:, None, :]

    v1c, e1c = sort_and_chunk(V_map1, E_map1)
    v2c, e2c = sort_and_chunk(V_map2, E_map2)

    # Kernel 2: one-hot matmul segment-sum + inner-dot + sigmoid, lane-dense output.
    out = aggregation_forward(z_p, v1c, e1c, v2c, e2c, e_pad, tile_e=tile_e)
    return out[0, :num_edges]  # matches torch: pred shape [num_edges]


def reference_forward(x, params, V_map1, V_map2, E_map1, E_map2, num_edges):
    """Pure-JAX reference of the PyTorch forward (eval mode)."""
    w1, b1, w2, b2 = params
    h = jnp.maximum(x @ w1 + b1, 0.0)
    z = jnp.maximum(h @ w2 + b2, 0.0)
    ze1 = jax.ops.segment_sum(z[V_map1], E_map1, num_segments=num_edges)
    ze2 = jax.ops.segment_sum(z[V_map2], E_map2, num_segments=num_edges)
    return jax.nn.sigmoid(jnp.sum(ze1 * ze2, axis=1))


if __name__ == "__main__":
    # Small shapes consistent with the module.
    N_NODES = 16      # number of node feature rows
    IN_DIM = 8
    HIDDEN = 32
    N_MAP = 24        # length of V_map / E_map index lists
    N_EDGES = 8

    key = jax.random.PRNGKey(0)
    kx, kw1, kb1, kw2, kb2, kv1, kv2, ke1, ke2 = jax.random.split(key, 9)

    # Node features.
    x = jax.random.normal(kx, (N_NODES, IN_DIM), dtype=jnp.float32)

    # Deterministic parameter init (nn.Linear-like uniform bounds), weights as [in, out].
    def init_linear(kw, kb, fan_in, fan_out):
        bound = 1.0 / jnp.sqrt(jnp.float32(fan_in))
        w = jax.random.uniform(kw, (fan_in, fan_out), jnp.float32, -bound, bound)
        b = jax.random.uniform(kb, (1, fan_out), jnp.float32, -bound, bound)
        return w, b

    w1, b1 = init_linear(kw1, kb1, IN_DIM, HIDDEN)
    w2, b2 = init_linear(kw2, kb2, HIDDEN, HIDDEN)
    params = (w1, b1, w2, b2)

    # Gather / scatter index maps.
    V_map1 = jax.random.randint(kv1, (N_MAP,), 0, N_NODES)
    V_map2 = jax.random.randint(kv2, (N_MAP,), 0, N_NODES)
    E_map1 = jax.random.randint(ke1, (N_MAP,), 0, N_EDGES)
    E_map2 = jax.random.randint(ke2, (N_MAP,), 0, N_EDGES)

    # TODO(synk): Dropout(p=0.5) is treated as eval-mode identity (no stochastic masking).

    pred = task1_mlp_forward(x, params, V_map1, V_map2, E_map1, E_map2, N_EDGES)
    pred = jax.block_until_ready(pred)

    ref = reference_forward(x, params, V_map1, V_map2, E_map1, E_map2, N_EDGES)
    assert pred.shape == (N_EDGES,)
    assert jnp.allclose(pred, ref, atol=1e-5, rtol=1e-5), (pred, ref)

    print("KERNEL_OK")
</pallas_src>

<mosaic_0001>
module attributes {stable_mosaic.version = 11 : i64} {
  func.func @mlp_kernel(%arg0: i32, %arg1: memref<16x128xf32, #tpu.memory_space<vmem>>, %arg2: memref<128x128xf32, #tpu.memory_space<vmem>>, %arg3: memref<1x128xf32, #tpu.memory_space<vmem>>, %arg4: memref<128x128xf32, #tpu.memory_space<vmem>>, %arg5: memref<1x128xf32, #tpu.memory_space<vmem>>, %arg6: memref<16x128xf32, #tpu.memory_space<vmem>>) attributes {dimension_semantics = [#tpu.dimension_semantics<parallel>], iteration_bounds = array<i64: 1>, scalar_prefetch = 0 : i64, scratch_operands = 0 : i64, tpu.core_type = #tpu.core_type<tc>, window_params = [{transform_indices = @transform_0, window_bounds = array<i64: 16, 128>}, {pipeline_mode = #tpu.pipeline_mode<synchronous>, transform_indices = @transform_1, window_bounds = array<i64: 128, 128>}, {pipeline_mode = #tpu.pipeline_mode<synchronous>, transform_indices = @transform_2, window_bounds = array<i64: 1, 128>}, {pipeline_mode = #tpu.pipeline_mode<synchronous>, transform_indices = @transform_3, window_bounds = array<i64: 128, 128>}, {pipeline_mode = #tpu.pipeline_mode<synchronous>, transform_indices = @transform_4, window_bounds = array<i64: 1, 128>}, {transform_indices = @transform_5, window_bounds = array<i64: 16, 128>}]} {
    %c0 = arith.constant 0 : index
    %c0_0 = arith.constant 0 : index
    %0 = vector.load %arg1[%c0, %c0_0] : memref<16x128xf32, #tpu.memory_space<vmem>>, vector<16x128xf32>
    %c0_1 = arith.constant 0 : index
    %c0_2 = arith.constant 0 : index
    %1 = vector.load %arg2[%c0_1, %c0_2] : memref<128x128xf32, #tpu.memory_space<vmem>>, vector<128x128xf32>
    %cst = arith.constant dense<0.000000e+00> : vector<16x128xf32>
    %2 = tpu.matmul %0, %1, %cst {dimension_numbers = #tpu.dot_dimension_numbers<[1], [0], [0], [1], [0, 0, 1, 1], [], []>} : vector<16x128xf32>, vector<128x128xf32>, vector<16x128xf32> -> vector<16x128xf32>
    %c0_3 = arith.constant 0 : index
    %c0_4 = arith.constant 0 : index
    %3 = vector.load %arg3[%c0_3, %c0_4] : memref<1x128xf32, #tpu.memory_space<vmem>>, vector<1x128xf32>
    %4 = vector.broadcast %3 : vector<1x128xf32> to vector<16x128xf32>
    %5 = arith.addf %2, %4 : vector<16x128xf32>
    %cst_5 = arith.constant 0.000000e+00 : f32
    %6 = vector.broadcast %cst_5 : f32 to vector<16x128xf32>
    %7 = arith.maximumf %5, %6 : vector<16x128xf32>
    %c0_6 = arith.constant 0 : index
    %c0_7 = arith.constant 0 : index
    %8 = vector.load %arg4[%c0_6, %c0_7] : memref<128x128xf32, #tpu.memory_space<vmem>>, vector<128x128xf32>
    %cst_8 = arith.constant dense<0.000000e+00> : vector<16x128xf32>
    %9 = tpu.matmul %7, %8, %cst_8 {dimension_numbers = #tpu.dot_dimension_numbers<[1], [0], [0], [1], [0, 0, 1, 1], [], []>} : vector<16x128xf32>, vector<128x128xf32>, vector<16x128xf32> -> vector<16x128xf32>
    %c0_9 = arith.constant 0 : index
    %c0_10 = arith.constant 0 : index
    %10 = vector.load %arg5[%c0_9, %c0_10] : memref<1x128xf32, #tpu.memory_space<vmem>>, vector<1x128xf32>
    %11 = vector.broadcast %10 : vector<1x128xf32> to vector<16x128xf32>
    %12 = arith.addf %9, %11 : vector<16x128xf32>
    %cst_11 = arith.constant 0.000000e+00 : f32
    %13 = vector.broadcast %cst_11 : f32 to vector<16x128xf32>
    %14 = arith.maximumf %12, %13 : vector<16x128xf32>
    %c0_12 = arith.constant 0 : index
    %c0_13 = arith.constant 0 : index
    %15 = vector.load %arg6[%c0_12, %c0_13] : memref<16x128xf32, #tpu.memory_space<vmem>>, vector<16x128xf32>
    tpu.vector_store %arg6[%c0_12, %c0_13], %14 {strides = array<i32>} : memref<16x128xf32, #tpu.memory_space<vmem>>, vector<16x128xf32>,
    return
  }
  func.func @transform_0(%arg0: i32) -> (i32, i32) {
    %c0_i32 = arith.constant 0 : i32
    %c0_i32_0 = arith.constant 0 : i32
    return %arg0, %c0_i32 : i32, i32
  }
  func.func @transform_1(%arg0: i32) -> (i32, i32) {
    %c0_i32 = arith.constant 0 : i32
    %c0_i32_0 = arith.constant 0 : i32
    %c0_i32_1 = arith.constant 0 : i32
    return %c0_i32, %c0_i32_0 : i32, i32
  }
  func.func @transform_2(%arg0: i32) -> (i32, i32) {
    %c0_i32 = arith.constant 0 : i32
    %c0_i32_0 = arith.constant 0 : i32
    %c0_i32_1 = arith.constant 0 : i32
    return %c0_i32, %c0_i32_0 : i32, i32
  }
  func.func @transform_3(%arg0: i32) -> (i32, i32) {
    %c0_i32 = arith.constant 0 : i32
    %c0_i32_0 = arith.constant 0 : i32
    %c0_i32_1 = arith.constant 0 : i32
    return %c0_i32, %c0_i32_0 : i32, i32
  }
  func.func @transform_4(%arg0: i32) -> (i32, i32) {
    %c0_i32 = arith.constant 0 : i32
    %c0_i32_0 = arith.constant 0 : i32
    %c0_i32_1 = arith.constant 0 : i32
    return %c0_i32, %c0_i32_0 : i32, i32
  }
  func.func @transform_5(%arg0: i32) -> (i32, i32) {
    %c0_i32 = arith.constant 0 : i32
    %c0_i32_0 = arith.constant 0 : i32
    return %arg0, %c0_i32 : i32, i32
  }
}

</mosaic_0001>

<llo_original>
// kernel: tpu_custom_call.1
$region0: #{tpu_custom_call.1}
  #allocation0 [shape = 'u32[]', space=smem, size = 0x4, offset = 0x4, fixed_abs, tag = 'smem constant byte address 0x4 - core index']
  #allocation1 [shape = 'u32[72,128]{1,0:T(1,128)}', space=vmem, size = 0x9000, scoped, tag = 'internal scratch']
  %s0 = inlined_call_operand.hbm [shape: f32[16,128], index: 0, kind: input, shape index: {}]
  %s1 = inlined_call_operand.hbm [shape: f32[128,128], index: 1, kind: input, shape index: {}]
  %s2 = inlined_call_operand.vmem [shape: f32[1,128], index: 2, kind: input, shape index: {}]
  %s3 = inlined_call_operand.hbm [shape: f32[128,128], index: 3, kind: input, shape index: {}]
  %s4 = inlined_call_operand.vmem [shape: f32[1,128], index: 4, kind: input, shape index: {}]
  %s5 = inlined_call_operand.hbm [shape: f32[16,128], index: 5, kind: output, shape index: {}]
  %s6 = sld [smem:[#allocation0]]
  $region42: #{tpu_custom_call.1} parent=0
    _
  %s8 = ssub.s32 1, %s6
  %s9 = scalar_select 0, %s8, %s6
  $region1: #{tpu_custom_call.1} parent=0
    #allocation2 [shape = 'u8[8192]{0}', space=vmem, size = 0x2000, scoped, tag = 'input window, operand 0, single buffered']
    #allocation3 [shape = 's32[1]{0}', space=sflag, size = 0x4, scoped, tag = 'scoped memory for tpu_custom_call.1']
    #allocation4 [shape = 's32[1]{0}', space=sflag, size = 0x4, scoped, tag = 'scoped memory for tpu_custom_call.1']
    #allocation5 [shape = 'u8[65536]{0}', space=vmem, size = 0x10000, scoped, tag = 'input window, operand 1, single buffered']
    #allocation6 [shape = 's32[1]{0}', space=sflag, size = 0x4, scoped, tag = 'scoped memory for tpu_custom_call.1']
    #allocation7 [shape = 'u8[65536]{0}', space=vmem, size = 0x10000, scoped, tag = 'input window, operand 3, single buffered']
    #allocation8 [shape = 'u8[8192]{0}', space=vmem, size = 0x2000, scoped, tag = 'output window, operand 0, single buffered']
    %10 = vsyncpa [#allocation3], 0
    %11 = vsyncpa [#allocation6], 0
    %12 = vsyncpa [#allocation4], 0
    // Predicated region
    $region2: #{tpu_custom_call.1} parent=1 // pred_check
      _
    $region3: #{tpu_custom_call.1} parent=1 // pred_check_branch
      %14 = sbr.rel (0) target = $region5
    $region4: #{tpu_custom_call.1} parent=1 // pred_region
      %16 = vsyncadd [#allocation3], 0
      %s17 = sshll.u32 %s0, 4
      %s18 = int_to_ptr.hbm [resolvable:$true] %s17
      %s19 = sshll.u32 [#allocation2], 4
      %s20 = int_to_ptr.vmem [resolvable:$true] %s19
      %25 = dma.hbm_to_vmem [thread:$0]  %s18, 256, %s20, [#allocation3], 128, 128, 8
    $region5: #{tpu_custom_call.1} parent=1 // pred_fallthru
      _
    // Predicated region
    $region6: #{tpu_custom_call.1} parent=1 // pred_check
      _
    $region7: #{tpu_custom_call.1} parent=1 // pred_check_branch
      %27 = sbr.rel (0) target = $region9
    $region8: #{tpu_custom_call.1} parent=1 // pred_region
      %29 = vsyncadd [#allocation6], 0
      %s30 = sshll.u32 %s1, 4
      %s31 = int_to_ptr.hbm [resolvable:$true] %s30
      %s32 = sshll.u32 [#allocation5], 4
      %s33 = int_to_ptr.vmem [resolvable:$true] %s32
      %38 = dma.hbm_to_vmem [thread:$0]  %s31, 2048, %s33, [#allocation6], 128, 128, 8
    $region9: #{tpu_custom_call.1} parent=1 // pred_fallthru
      _
    // Predicated region
    $region10: #{tpu_custom_call.1} parent=1 // pred_check
      _
    $region11: #{tpu_custom_call.1} parent=1 // pred_check_branch
      %40 = sbr.rel (0) target = $region13
    $region12: #{tpu_custom_call.1} parent=1 // pred_region
      _
    $region13: #{tpu_custom_call.1} parent=1 // pred_fallthru
      _
    // Predicated region
    $region14: #{tpu_custom_call.1} parent=1 // pred_check
      _
    $region15: #{tpu_custom_call.1} parent=1 // pred_check_branch
      %42 = sbr.rel (0) target = $region17
    $region16: #{tpu_custom_call.1} parent=1 // pred_region
      %44 = vsyncadd [#allocation6], 0
      %s45 = sshll.u32 %s3, 4
      %s46 = int_to_ptr.hbm [resolvable:$true] %s45
      %s47 = sshll.u32 [#allocation7], 4
      %s48 = int_to_ptr.vmem [resolvable:$true] %s47
      %53 = dma.hbm_to_vmem [thread:$0]  %s46, 2048, %s48, [#allocation6], 128, 128, 8
    $region17: #{tpu_custom_call.1} parent=1 // pred_fallthru
      _
    // Predicated region
    $region18: #{tpu_custom_call.1} parent=1 // pred_check
      _
    $region19: #{tpu_custom_call.1} parent=1 // pred_check_branch
      %55 = sbr.rel (0) target = $region21
    $region20: #{tpu_custom_call.1} parent=1 // pred_region
      _
    $region21: #{tpu_custom_call.1} parent=1 // pred_fallthru
      _
    // Predicated region
    $region22: #{tpu_custom_call.1} parent=1 // pred_check
      _
    $region23: #{tpu_custom_call.1} parent=1 // pred_check_branch
      %57 = sbr.rel (0) target = $region25
    $region24: #{tpu_custom_call.1} parent=1 // pred_region
      %59 = dma.done [#allocation3], 256
    $region25: #{tpu_custom_call.1} parent=1 // pred_fallthru
      _
    // Predicated region
    $region26: #{tpu_custom_call.1} parent=1 // pred_check
      _
    $region27: #{tpu_custom_call.1} parent=1 // pred_check_branch
      %61 = sbr.rel (0) target = $region29
    $region28: #{tpu_custom_call.1} parent=1 // pred_region
      %63 = dma.done [#allocation6], 2048
    $region29: #{tpu_custom_call.1} parent=1 // pred_fallthru
      _
    // Predicated region
    $region30: #{tpu_custom_call.1} parent=1 // pred_check
      _
    $region31: #{tpu_custom_call.1} parent=1 // pred_check_branch
      %65 = sbr.rel (0) target = $region33
    $region32: #{tpu_custom_call.1} parent=1 // pred_region
      %67 = dma.done [#allocation6], 2048
    $region33: #{tpu_custom_call.1} parent=1 // pred_fallthru
      _
    %v68 = vld [vmem:[#allocation2] sm:$0xff]
    %v69 = vld [vmem:[#allocation2 + $0x8] sm:$0xff]
    %v70 = vld [vmem:[#allocation5] sm:$0xff]
    %v71 = vld [vmem:[#allocation5 + $0x8] sm:$0xff]
    %v72 = vld [vmem:[#allocation5 + $0x10] sm:$0xff]
    %v73 = vld [vmem:[#allocation5 + $0x18] sm:$0xff]
    %v74 = vld [vmem:[#allocation5 + $0x20] sm:$0xff]
    %v75 = vld [vmem:[#allocation5 + $0x28] sm:$0xff]
    %v76 = vld [vmem:[#allocation5 + $0x30] sm:$0xff]
    %v77 = vld [vmem:[#allocation5 + $0x38] sm:$0xff]
    %v78 = vld [vmem:[#allocation5 + $0x40] sm:$0xff]
    %v79 = vld [vmem:[#allocation5 + $0x48] sm:$0xff]
    %v80 = vld [vmem:[#allocation5 + $0x50] sm:$0xff]
    %v81 = vld [vmem:[#allocation5 + $0x58] sm:$0xff]
    %v82 = vld [vmem:[#allocation5 + $0x60] sm:$0xff]
    %v83 = vld [vmem:[#allocation5 + $0x68] sm:$0xff]
    %v84 = vld [vmem:[#allocation5 + $0x70] sm:$0xff]
    %v85 = vld [vmem:[#allocation5 + $0x78] sm:$0xff]
    %v86 = vld [vmem:[%s2] sm:$0x1]
    %v88 = vperm.slane %v86, 0
    %90 = vmatpush.msra.mxu0 %v85
    %91 = vmatpush.msra.mxu0 %v84
    %92 = vmatpush.msra.mxu0 %v83
    %93 = vmatpush.msra.mxu0 %v82
    %94 = vmatpush.msra.mxu0 %v81
    %95 = vmatpush.msra.mxu0 %v80
    %96 = vmatpush.msra.mxu0 %v79
    %97 = vmatpush.msra.mxu0 %v78
    %98 = vmatpush.msra.mxu0 %v77
    %99 = vmatpush.msra.mxu0 %v76
    %100 = vmatpush.msra.mxu0 %v75
    %101 = vmatpush.msra.mxu0 %v74
    %102 = vmatpush.msra.mxu0 %v73
    %103 = vmatpush.msra.mxu0 %v72
    %104 = vmatpush.msra.mxu0 %v71
    %105 = vmatpush.msra.mxu0 %v70
    %106 = vmatmul.f32.gmra.mxu0 %v68
    %v107 = vpop.f32.mrf.mxu0
    %v108 = vadd.f32 %v88, %v107
    %109 = vmatmul.f32.gmra.mxu0 %v69
    %v110 = vpop.f32.mrf.mxu0
    %v111 = vadd.f32 %v88, %v110
    %112 = vdwg.mxu0
    %v113 = vmax.f32 %v108, 0.0
    %v114 = vmax.f32 %v111, 0.0
    %v115 = vld [vmem:[#allocation7] sm:$0xff]
    %v116 = vld [vmem:[#allocation7 + $0x8] sm:$0xff]
    %v117 = vld [vmem:[#allocation7 + $0x10] sm:$0xff]
    %v118 = vld [vmem:[#allocation7 + $0x18] sm:$0xff]
    %v119 = vld [vmem:[#allocation7 + $0x20] sm:$0xff]
    %v120 = vld [vmem:[#allocation7 + $0x28] sm:$0xff]
    %v121 = vld [vmem:[#allocation7 + $0x30] sm:$0xff]
    %v122 = vld [vmem:[#allocation7 + $0x38] sm:$0xff]
    %v123 = vld [vmem:[#allocation7 + $0x40] sm:$0xff]
    %v124 = vld [vmem:[#allocation7 + $0x48] sm:$0xff]
    %v125 = vld [vmem:[#allocation7 + $0x50] sm:$0xff]
    %v126 = vld [vmem:[#allocation7 + $0x58] sm:$0xff]
    %v127 = vld [vmem:[#allocation7 + $0x60] sm:$0xff]
    %v128 = vld [vmem:[#allocation7 + $0x68] sm:$0xff]
    %v129 = vld [vmem:[#allocation7 + $0x70] sm:$0xff]
    %v130 = vld [vmem:[#allocation7 + $0x78] sm:$0xff]
    %v131 = vld [vmem:[%s4] sm:$0x1]
    %v133 = vperm.slane %v131, 0
    %135 = vmatpush.msra.mxu0 %v130
    %136 = vmatpush.msra.mxu0 %v129
    %137 = vmatpush.msra.mxu0 %v128
    %138 = vmatpush.msra.mxu0 %v127
    %139 = vmatpush.msra.mxu0 %v126
    %140 = vmatpush.msra.mxu0 %v125
    %141 = vmatpush.msra.mxu0 %v124
    %142 = vmatpush.msra.mxu0 %v123
    %143 = vmatpush.msra.mxu0 %v122
    %144 = vmatpush.msra.mxu0 %v121
    %145 = vmatpush.msra.mxu0 %v120
    %146 = vmatpush.msra.mxu0 %v119
    %147 = vmatpush.msra.mxu0 %v118
    %148 = vmatpush.msra.mxu0 %v117
    %149 = vmatpush.msra.mxu0 %v116
    %150 = vmatpush.msra.mxu0 %v115
    %151 = vmatmul.f32.gmra.mxu0 %v113
    %v152 = vpop.f32.mrf.mxu0
    %v153 = vadd.f32 %v133, %v152
    %154 = vmatmul.f32.gmra.mxu0 %v114
    %v155 = vpop.f32.mrf.mxu0
    %v156 = vadd.f32 %v133, %v155
    %157 = vdwg.mxu0
    %v158 = vmax.f32 %v153, 0.0
    %v159 = vmax.f32 %v156, 0.0
    %160 = vst [vmem:[#allocation8] sm:$0xff] %v158
    %161 = vst [vmem:[#allocation8 + $0x8] sm:$0xff] %v159
    // Predicated region
    $region34: #{tpu_custom_call.1} parent=1 // pred_check
      _
    $region35: #{tpu_custom_call.1} parent=1 // pred_check_branch
      %163 = sbr.rel (0) target = $region37
    $region36: #{tpu_custom_call.1} parent=1 // pred_region
      %165 = vsyncadd [#allocation4], 0
      %s166 = sshll.u32 [#allocation8], 4
      %s167 = int_to_ptr.vmem [resolvable:$true] %s166
      %s168 = sshll.u32 %s5, 4
      %s169 = int_to_ptr.hbm [resolvable:$true] %s168
      %174 = dma.vmem_to_hbm [thread:$0]  %s167, 256, %s169, [#allocation4], 128, 128, 8
    $region37: #{tpu_custom_call.1} parent=1 // pred_fallthru
      _
    // Predicated region
    $region38: #{tpu_custom_call.1} parent=1 // pred_check
      _
    $region39: #{tpu_custom_call.1} parent=1 // pred_check_branch
      %176 = sbr.rel (0) target = $region41
    $region40: #{tpu_custom_call.1} parent=1 // pred_region
      %178 = dma.done [#allocation4], 256
    $region41: #{tpu_custom_call.1} parent=1 // pred_fallthru
      _
    %179 = vsyncpa [#allocation3], 1
    %180 = vsyncpa [#allocation6], 1
    %181 = vsyncpa [#allocation4], 1

</llo_original>
